<compile_context>
chip_gen: v6e
topology: v6e:2x2x1
jax: 0.10.0
libtpu: 0.0.40
codegen_flags: <defaults>
</compile_context>

<pallas_src>
import jax
import jax.numpy as jnp
from jax.experimental import pallas as pl
from jax.experimental.pallas import tpu as pltpu

_LANES = 128


# ------------------------------ kernel body -------------------------------- #

def _softplus(z):
    # Branch-free, numerically stable softplus (matches torch.nn.Softplus).
    return jnp.maximum(z, 0.0) + jnp.log1p(jnp.exp(-jnp.abs(z)))


def _fused_chain_kernel(t_ref, w1_ref, b1_ref, w2_ref, b2_ref, x_ref, o_ref):
    """All L TimeDependentSwish layers applied to one resident x tile.

    t  : (TB, R)        R packed batch scalars per lane-row
    w1 : (L, R, R*H)    kron(I_R, w1_l)  (block-diagonal)
    b1 : (L, 1, R*H)
    w2 : (L, R*H, LW)   kron(I_R, w2_l_padded),  LW = R*Dpad (multiple of 128)
    b2 : (L, 1, LW)
    x/o: (TB, LW)       lane-dense packed activations
    """
    L = w1_ref.shape[0]
    wdt = w1_ref.dtype
    t = t_ref[...].astype(wdt)
    x = x_ref[...].astype(jnp.float32)
    # L is small and static: unrolled Python loop keeps x in VMEM/vregs across
    # layers -- no HBM round trip between layers.
    for layer in range(L):
        # Layer 1 stays on the MXU (K = R is tiny); only worth moving to the
        # VPU if a bundle dump shows the MXU push on the critical path.
        h = _softplus(
            jnp.dot(t, w1_ref[layer], preferred_element_type=jnp.float32)
            + b1_ref[layer])
        beta = _softplus(
            jnp.dot(h.astype(wdt), w2_ref[layer],
                    preferred_element_type=jnp.float32)
            + b2_ref[layer])
        # swish gate: x * sigmoid(x * beta); sigmoid via one EUP tanh, no divide.
        x = x * (0.5 * (jnp.tanh(0.5 * (x * beta)) + 1.0))
    o_ref[...] = x.astype(o_ref.dtype)


# --------------------------- one-time weight packing ------------------------ #

def _pad_feature_dim(d, max_r=8):
    """Pad D up so the packed layout is lane-dense and R = LW/Dpad <= max_r."""
    if d % _LANES == 0:
        return d, 1
    if d > _LANES:
        return ((d + _LANES - 1) // _LANES) * _LANES, 1
    dpad = next(c for c in (1, 2, 4, 8, 16, 32, 64, 128) if c >= d)
    dpad = max(dpad, _LANES // max_r)          # guard the kron blow-up
    return dpad, _LANES // dpad


def prepare_layers(layers, *, max_r=8, weight_dtype=jnp.float32):
    """One-time packing of a homogeneous TimeDependentSwish chain.

    layers: list of (w1 (1,H), b1 (1,H), w2 (H,D), b2 (1,D)).
    Call once (outside the ODE-solver loop); the result is reused every step.
    """
    H, D = layers[0][2].shape
    L = len(layers)
    for (w1, b1, w2, b2) in layers:
        assert w1.shape == (1, H) and b1.shape == (1, H)
        assert w2.shape == (H, D) and b2.shape == (1, D)

    Dpad, R = _pad_feature_dim(D, max_r=max_r)
    LW = R * Dpad                                   # lane width, multiple of 128
    eye = jnp.eye(R, dtype=jnp.float32)

    w1p, b1p, w2p, b2p = [], [], [], []
    for (w1, b1, w2, b2) in layers:
        w2f = jnp.pad(w2.astype(jnp.float32), ((0, 0), (0, Dpad - D)))
        b2f = jnp.pad(b2.astype(jnp.float32), ((0, 0), (0, Dpad - D)))
        w1p.append(jnp.kron(eye, w1.astype(jnp.float32)))      # (R, R*H)
        b1p.append(jnp.tile(b1.astype(jnp.float32), (1, R)))   # (1, R*H)
        w2p.append(jnp.kron(eye, w2f))                         # (R*H, LW)
        b2p.append(jnp.tile(b2f, (1, R)))                      # (1, LW)

    return dict(
        L=L, H=H, D=D, Dpad=Dpad, R=R, LW=LW,
        w1=jnp.stack(w1p).astype(weight_dtype),    # matmul operands (bf16 opt.)
        b1=jnp.stack(b1p),                         # biases stay f32 (post-acc add)
        w2=jnp.stack(w2p).astype(weight_dtype),
        b2=jnp.stack(b2p),
    )


# ------------------------------ call wrapper -------------------------------- #

def _sublane_multiple(dtype):
    return max(8, 32 // jnp.dtype(dtype).itemsize)   # 8 f32 / 16 bf16 / 32 int8


def _pick_block_rows(bp, want, *, row_bytes, sublane, vmem_budget=12 << 20):
    if want is None:
        want = max(sublane, vmem_budget // row_bytes)
        if bp > sublane:                    # leave >= 2 grid steps for megacore
            want = min(want, -(-bp // 2))
    want = min(max(want, sublane), max(bp, sublane))
    return max(sublane, (want // sublane) * sublane)


def sequential_diffeq(t, x, packed_or_layers, *, block_rows=None):
    """SequentialDiffEq.forward: t (B,), x (B, D) -> (B, D), all layers fused."""
    packed = packed_or_layers
    if not isinstance(packed, dict):
        packed = prepare_layers(packed_or_layers)   # convenience; hoist in loops

    B, D = x.shape
    assert D == packed["D"]
    L, H = packed["L"], packed["H"]
    Dpad, R, LW = packed["Dpad"], packed["R"], packed["LW"]
    out_dtype = x.dtype
    t = t.reshape(-1).astype(jnp.float32)
    assert t.shape[0] == B

    sublane = _sublane_multiple(out_dtype)
    row_bytes = 4 * (6 * LW + R * H)                # x/out dbl-buffered + h + beta
    bp0 = -(-B // R)
    tbp = _pick_block_rows(bp0, block_rows, row_bytes=row_bytes, sublane=sublane)
    bp = -(-bp0 // tbp) * tbp                       # whole number of blocks
    b_full = bp * R

    if b_full != B or Dpad != D:
        # Zero padding keeps softplus/tanh finite on padded rows/lanes.
        x_in = jnp.zeros((b_full, Dpad), out_dtype).at[:B, :D].set(x)
        t_in = jnp.zeros((b_full,), jnp.float32).at[:B].set(t)
    else:
        x_in, t_in = x, t

    xp = x_in.reshape(bp, LW)                       # free row-major repack
    tp = t_in.reshape(bp, R)

    itemsize = jnp.dtype(out_dtype).itemsize
    w_bytes = 4 * L * (R * R * H + R * H + R * H * LW + LW)
    cost = pl.CostEstimate(
        flops=int(L * (2 * bp * R * R * H + 2 * bp * R * H * LW + 8 * bp * LW)),
        transcendentals=int(L * (2 * bp * R * H + 3 * bp * LW)),
        bytes_accessed=int(2 * bp * LW * itemsize + 4 * bp * R + w_bytes),
    )
    # Tile budget (~12 MiB) stays under every generation's default scoped VMEM
    # limit, so no explicit vmem_limit_bytes is needed.
    cparams = pltpu.CompilerParams(dimension_semantics=("parallel",))

    outp = pl.pallas_call(
        _fused_chain_kernel,
        out_shape=jax.ShapeDtypeStruct((bp, LW), out_dtype),
        grid=(bp // tbp,),
        in_specs=[
            pl.BlockSpec((tbp, R), lambda i: (i, 0)),
            pl.BlockSpec((L, R, R * H), lambda i: (0, 0, 0)),
            pl.BlockSpec((L, 1, R * H), lambda i: (0, 0, 0)),
            pl.BlockSpec((L, R * H, LW), lambda i: (0, 0, 0)),
            pl.BlockSpec((L, 1, LW), lambda i: (0, 0, 0)),
            pl.BlockSpec((tbp, LW), lambda i: (i, 0)),
        ],
        out_specs=pl.BlockSpec((tbp, LW), lambda i: (i, 0)),
        compiler_params=cparams,
        cost_estimate=cost,
    )(tp, packed["w1"], packed["b1"], packed["w2"], packed["b2"], xp)

    out = outp.reshape(b_full, Dpad)
    if b_full != B or Dpad != D:
        out = out[:B, :D]
    return out


# ---------------------------------- demo ------------------------------------ #

def _reference_layer(t, x, w1, b1, w2, b2):
    t_col = t.reshape(-1, 1).astype(jnp.float32)
    h = jax.nn.softplus(t_col @ w1 + b1)
    beta = jax.nn.softplus(h @ w2 + b2)
    return x * jax.nn.sigmoid(x * beta)


def _reference_chain(t, x, layers):
    for (w1, b1, w2, b2) in layers:
        x = _reference_layer(t, x, w1, b1, w2, b2)
    return x


def _init_params(key, dim):
    hidden = min(64, 4 * dim)
    k_w1, k_b1, k_w2, k_b2 = jax.random.split(key, 4)
    bound2 = 1.0 / jnp.sqrt(float(hidden))
    w1 = jax.random.uniform(k_w1, (1, hidden), jnp.float32, -1.0, 1.0)
    b1 = jax.random.uniform(k_b1, (1, hidden), jnp.float32, -1.0, 1.0)
    w2 = jax.random.uniform(k_w2, (hidden, dim), jnp.float32, -bound2, bound2)
    b2 = jax.random.uniform(k_b2, (1, dim), jnp.float32, -bound2, bound2)
    return w1, b1, w2, b2


if __name__ == "__main__":
    key = jax.random.PRNGKey(0)
    k1, k2, k3, k_t1, k_x1, k_t2, k_x2, _ = jax.random.split(key, 8)

    # Case 1: D=32 divides 128 (R=4 packing), 2-layer chain fused into one
    # pallas_call; block_rows=8 forces a 2-step "parallel" batch grid.
    dim, B = 32, 64
    layers1 = [_init_params(k1, dim), _init_params(k2, dim)]
    packed1 = prepare_layers(layers1)                 # one-time packing
    t1 = jax.random.uniform(k_t1, (B,), jnp.float32)
    x1 = jax.random.normal(k_x1, (B, dim), jnp.float32)

    out1 = jax.block_until_ready(sequential_diffeq(t1, x1, packed1, block_rows=8))
    ref1 = _reference_chain(t1, x1, layers1)
    assert out1.shape == (B, dim)
    assert jnp.allclose(out1, ref1, atol=1e-5, rtol=1e-5), "fused packed mismatch"

    # Case 2: D=48 (padded to 64, R=2) -- lane-dense padded path replaces the
    # old lane-sparse fallback; auto block sizing.
    dim2, B2 = 48, 32
    layers2 = [_init_params(k3, dim2)]
    packed2 = prepare_layers(layers2)
    t2 = jax.random.uniform(k_t2, (B2,), jnp.float32)
    x2 = jax.random.normal(k_x2, (B2, dim2), jnp.float32)

    out2 = jax.block_until_ready(sequential_diffeq(t2, x2, packed2))
    ref2 = _reference_chain(t2, x2, layers2)
    assert out2.shape == (B2, dim2)
    assert jnp.allclose(out2, ref2, atol=1e-5, rtol=1e-5), "padded-D mismatch"

    # Case 3: bf16 activations exercise the dtype-aware (16-row) block rounding.
    x1_bf = x1.astype(jnp.bfloat16)
    out3 = jax.block_until_ready(sequential_diffeq(t1, x1_bf, packed1))
    ref3 = _reference_chain(t1, x1_bf.astype(jnp.float32), layers1)
    assert out3.dtype == jnp.bfloat16
    assert jnp.allclose(out3.astype(jnp.float32), ref3, atol=5e-2, rtol=5e-2), \
        "bf16 path mismatch"

    print("KERNEL_OK")
</pallas_src>

<mosaic_0001>
module attributes {stable_mosaic.version = 11 : i64} {
  func.func @_fused_chain_kernel(%arg0: i32, %arg1: memref<8x4xf32, #tpu.memory_space<vmem>>, %arg2: memref<2x4x256xf32, #tpu.memory_space<vmem>>, %arg3: memref<2x1x256xf32, #tpu.memory_space<vmem>>, %arg4: memref<2x256x128xf32, #tpu.memory_space<vmem>>, %arg5: memref<2x1x128xf32, #tpu.memory_space<vmem>>, %arg6: memref<8x128xf32, #tpu.memory_space<vmem>>, %arg7: memref<8x128xf32, #tpu.memory_space<vmem>>) attributes {dimension_semantics = [#tpu.dimension_semantics<parallel>], iteration_bounds = array<i64: 2>, scalar_prefetch = 0 : i64, scratch_operands = 0 : i64, tpu.core_type = #tpu.core_type<tc>, window_params = [{transform_indices = @transform_0, window_bounds = array<i64: 8, 4>}, {pipeline_mode = #tpu.pipeline_mode<synchronous>, transform_indices = @transform_1, window_bounds = array<i64: 2, 4, 256>}, {pipeline_mode = #tpu.pipeline_mode<synchronous>, transform_indices = @transform_2, window_bounds = array<i64: 2, 1, 256>}, {pipeline_mode = #tpu.pipeline_mode<synchronous>, transform_indices = @transform_3, window_bounds = array<i64: 2, 256, 128>}, {pipeline_mode = #tpu.pipeline_mode<synchronous>, transform_indices = @transform_4, window_bounds = array<i64: 2, 1, 128>}, {transform_indices = @transform_5, window_bounds = array<i64: 8, 128>}, {transform_indices = @transform_6, window_bounds = array<i64: 8, 128>}]} {
    %c0 = arith.constant 0 : index
    %c0_0 = arith.constant 0 : index
    %0 = vector.load %arg1[%c0, %c0_0] : memref<8x4xf32, #tpu.memory_space<vmem>>, vector<8x4xf32>
    %c0_1 = arith.constant 0 : index
    %c0_2 = arith.constant 0 : index
    %1 = vector.load %arg6[%c0_1, %c0_2] : memref<8x128xf32, #tpu.memory_space<vmem>>, vector<8x128xf32>
    %c0_3 = arith.constant 0 : index
    %c0_4 = arith.constant 0 : index
    %c0_5 = arith.constant 0 : index
    %2 = vector.load %arg2[%c0_3, %c0_4, %c0_5] : memref<2x4x256xf32, #tpu.memory_space<vmem>>, vector<1x4x256xf32>
    %3 = vector.shape_cast %2 : vector<1x4x256xf32> to vector<4x256xf32>
    %cst = arith.constant dense<0.000000e+00> : vector<8x256xf32>
    %4 = tpu.matmul %0, %3, %cst {dimension_numbers = #tpu.dot_dimension_numbers<[1], [0], [0], [1], [0, 0, 1, 1], [], []>} : vector<8x4xf32>, vector<4x256xf32>, vector<8x256xf32> -> vector<8x256xf32>
    %c0_6 = arith.constant 0 : index
    %c0_7 = arith.constant 0 : index
    %c0_8 = arith.constant 0 : index
    %5 = vector.load %arg3[%c0_6, %c0_7, %c0_8] : memref<2x1x256xf32, #tpu.memory_space<vmem>>, vector<1x1x256xf32>
    %6 = vector.shape_cast %5 : vector<1x1x256xf32> to vector<1x256xf32>
    %7 = vector.broadcast %6 : vector<1x256xf32> to vector<8x256xf32>
    %8 = arith.addf %4, %7 : vector<8x256xf32>
    %cst_9 = arith.constant 0.000000e+00 : f32
    %9 = vector.broadcast %cst_9 : f32 to vector<8x256xf32>
    %10 = arith.maximumf %8, %9 : vector<8x256xf32>
    %11 = math.absf %8 : vector<8x256xf32>
    %cst_10 = arith.constant 0.000000e+00 : f32
    %12 = vector.broadcast %cst_10 : f32 to vector<8x256xf32>
    %13 = arith.subf %12, %11 : vector<8x256xf32>
    %14 = math.exp %13 : vector<8x256xf32>
    %15 = math.log1p %14 : vector<8x256xf32>
    %16 = arith.addf %10, %15 : vector<8x256xf32>
    %c0_11 = arith.constant 0 : index
    %c0_12 = arith.constant 0 : index
    %c0_13 = arith.constant 0 : index
    %17 = vector.load %arg4[%c0_11, %c0_12, %c0_13] : memref<2x256x128xf32, #tpu.memory_space<vmem>>, vector<1x256x128xf32>
    %18 = vector.shape_cast %17 : vector<1x256x128xf32> to vector<256x128xf32>
    %cst_14 = arith.constant dense<0.000000e+00> : vector<8x128xf32>
    %19 = tpu.matmul %16, %18, %cst_14 {dimension_numbers = #tpu.dot_dimension_numbers<[1], [0], [0], [1], [0, 0, 1, 1], [], []>} : vector<8x256xf32>, vector<256x128xf32>, vector<8x128xf32> -> vector<8x128xf32>
    %c0_15 = arith.constant 0 : index
    %c0_16 = arith.constant 0 : index
    %c0_17 = arith.constant 0 : index
    %20 = vector.load %arg5[%c0_15, %c0_16, %c0_17] : memref<2x1x128xf32, #tpu.memory_space<vmem>>, vector<1x1x128xf32>
    %21 = vector.shape_cast %20 : vector<1x1x128xf32> to vector<1x128xf32>
    %22 = vector.broadcast %21 : vector<1x128xf32> to vector<8x128xf32>
    %23 = arith.addf %19, %22 : vector<8x128xf32>
    %cst_18 = arith.constant 0.000000e+00 : f32
    %24 = vector.broadcast %cst_18 : f32 to vector<8x128xf32>
    %25 = arith.maximumf %23, %24 : vector<8x128xf32>
    %26 = math.absf %23 : vector<8x128xf32>
    %cst_19 = arith.constant 0.000000e+00 : f32
    %27 = vector.broadcast %cst_19 : f32 to vector<8x128xf32>
    %28 = arith.subf %27, %26 : vector<8x128xf32>
    %29 = math.exp %28 : vector<8x128xf32>
    %30 = math.log1p %29 : vector<8x128xf32>
    %31 = arith.addf %25, %30 : vector<8x128xf32>
    %32 = arith.mulf %1, %31 : vector<8x128xf32>
    %cst_20 = arith.constant 5.000000e-01 : f32
    %33 = vector.broadcast %cst_20 : f32 to vector<8x128xf32>
    %34 = arith.mulf %33, %32 : vector<8x128xf32>
    %35 = math.tanh %34 : vector<8x128xf32>
    %cst_21 = arith.constant 1.000000e+00 : f32
    %36 = vector.broadcast %cst_21 : f32 to vector<8x128xf32>
    %37 = arith.addf %35, %36 : vector<8x128xf32>
    %cst_22 = arith.constant 5.000000e-01 : f32
    %38 = vector.broadcast %cst_22 : f32 to vector<8x128xf32>
    %39 = arith.mulf %38, %37 : vector<8x128xf32>
    %40 = arith.mulf %1, %39 : vector<8x128xf32>
    %c1 = arith.constant 1 : index
    %c0_23 = arith.constant 0 : index
    %c0_24 = arith.constant 0 : index
    %41 = vector.load %arg2[%c1, %c0_23, %c0_24] : memref<2x4x256xf32, #tpu.memory_space<vmem>>, vector<1x4x256xf32>
    %42 = vector.shape_cast %41 : vector<1x4x256xf32> to vector<4x256xf32>
    %cst_25 = arith.constant dense<0.000000e+00> : vector<8x256xf32>
    %43 = tpu.matmul %0, %42, %cst_25 {dimension_numbers = #tpu.dot_dimension_numbers<[1], [0], [0], [1], [0, 0, 1, 1], [], []>} : vector<8x4xf32>, vector<4x256xf32>, vector<8x256xf32> -> vector<8x256xf32>
    %c1_26 = arith.constant 1 : index
    %c0_27 = arith.constant 0 : index
    %c0_28 = arith.constant 0 : index
    %44 = vector.load %arg3[%c1_26, %c0_27, %c0_28] : memref<2x1x256xf32, #tpu.memory_space<vmem>>, vector<1x1x256xf32>
    %45 = vector.shape_cast %44 : vector<1x1x256xf32> to vector<1x256xf32>
    %46 = vector.broadcast %45 : vector<1x256xf32> to vector<8x256xf32>
    %47 = arith.addf %43, %46 : vector<8x256xf32>
    %cst_29 = arith.constant 0.000000e+00 : f32
    %48 = vector.broadcast %cst_29 : f32 to vector<8x256xf32>
    %49 = arith.maximumf %47, %48 : vector<8x256xf32>
    %50 = math.absf %47 : vector<8x256xf32>
    %cst_30 = arith.constant 0.000000e+00 : f32
    %51 = vector.broadcast %cst_30 : f32 to vector<8x256xf32>
    %52 = arith.subf %51, %50 : vector<8x256xf32>
    %53 = math.exp %52 : vector<8x256xf32>
    %54 = math.log1p %53 : vector<8x256xf32>
    %55 = arith.addf %49, %54 : vector<8x256xf32>
    %c1_31 = arith.constant 1 : index
    %c0_32 = arith.constant 0 : index
    %c0_33 = arith.constant 0 : index
    %56 = vector.load %arg4[%c1_31, %c0_32, %c0_33] : memref<2x256x128xf32, #tpu.memory_space<vmem>>, vector<1x256x128xf32>
    %57 = vector.shape_cast %56 : vector<1x256x128xf32> to vector<256x128xf32>
    %cst_34 = arith.constant dense<0.000000e+00> : vector<8x128xf32>
    %58 = tpu.matmul %55, %57, %cst_34 {dimension_numbers = #tpu.dot_dimension_numbers<[1], [0], [0], [1], [0, 0, 1, 1], [], []>} : vector<8x256xf32>, vector<256x128xf32>, vector<8x128xf32> -> vector<8x128xf32>
    %c1_35 = arith.constant 1 : index
    %c0_36 = arith.constant 0 : index
    %c0_37 = arith.constant 0 : index
    %59 = vector.load %arg5[%c1_35, %c0_36, %c0_37] : memref<2x1x128xf32, #tpu.memory_space<vmem>>, vector<1x1x128xf32>
    %60 = vector.shape_cast %59 : vector<1x1x128xf32> to vector<1x128xf32>
    %61 = vector.broadcast %60 : vector<1x128xf32> to vector<8x128xf32>
    %62 = arith.addf %58, %61 : vector<8x128xf32>
    %cst_38 = arith.constant 0.000000e+00 : f32
    %63 = vector.broadcast %cst_38 : f32 to vector<8x128xf32>
    %64 = arith.maximumf %62, %63 : vector<8x128xf32>
    %65 = math.absf %62 : vector<8x128xf32>
    %cst_39 = arith.constant 0.000000e+00 : f32
    %66 = vector.broadcast %cst_39 : f32 to vector<8x128xf32>
    %67 = arith.subf %66, %65 : vector<8x128xf32>
    %68 = math.exp %67 : vector<8x128xf32>
    %69 = math.log1p %68 : vector<8x128xf32>
    %70 = arith.addf %64, %69 : vector<8x128xf32>
    %71 = arith.mulf %40, %70 : vector<8x128xf32>
    %cst_40 = arith.constant 5.000000e-01 : f32
    %72 = vector.broadcast %cst_40 : f32 to vector<8x128xf32>
    %73 = arith.mulf %72, %71 : vector<8x128xf32>
    %74 = math.tanh %73 : vector<8x128xf32>
    %cst_41 = arith.constant 1.000000e+00 : f32
    %75 = vector.broadcast %cst_41 : f32 to vector<8x128xf32>
    %76 = arith.addf %74, %75 : vector<8x128xf32>
    %cst_42 = arith.constant 5.000000e-01 : f32
    %77 = vector.broadcast %cst_42 : f32 to vector<8x128xf32>
    %78 = arith.mulf %77, %76 : vector<8x128xf32>
    %79 = arith.mulf %40, %78 : vector<8x128xf32>
    %c0_43 = arith.constant 0 : index
    %c0_44 = arith.constant 0 : index
    %80 = vector.load %arg7[%c0_43, %c0_44] : memref<8x128xf32, #tpu.memory_space<vmem>>, vector<8x128xf32>
    tpu.vector_store %arg7[%c0_43, %c0_44], %79 {strides = array<i32>} : memref<8x128xf32, #tpu.memory_space<vmem>>, vector<8x128xf32>,
    return
  }
  func.func @transform_0(%arg0: i32) -> (i32, i32) {
    %c0_i32 = arith.constant 0 : i32
    %c0_i32_0 = arith.constant 0 : i32
    return %arg0, %c0_i32 : i32, i32
  }
  func.func @transform_1(%arg0: i32) -> (i32, i32, i32) {
    %c0_i32 = arith.constant 0 : i32
    %c0_i32_0 = arith.constant 0 : i32
    %c0_i32_1 = arith.constant 0 : i32
    %c0_i32_2 = arith.constant 0 : i32
    return %c0_i32, %c0_i32_0, %c0_i32_1 : i32, i32, i32
  }
  func.func @transform_2(%arg0: i32) -> (i32, i32, i32) {
    %c0_i32 = arith.constant 0 : i32
    %c0_i32_0 = arith.constant 0 : i32
    %c0_i32_1 = arith.constant 0 : i32
    %c0_i32_2 = arith.constant 0 : i32
    return %c0_i32, %c0_i32_0, %c0_i32_1 : i32, i32, i32
  }
  func.func @transform_3(%arg0: i32) -> (i32, i32, i32) {
    %c0_i32 = arith.constant 0 : i32
    %c0_i32_0 = arith.constant 0 : i32
    %c0_i32_1 = arith.constant 0 : i32
    %c0_i32_2 = arith.constant 0 : i32
    return %c0_i32, %c0_i32_0, %c0_i32_1 : i32, i32, i32
  }
  func.func @transform_4(%arg0: i32) -> (i32, i32, i32) {
    %c0_i32 = arith.constant 0 : i32
    %c0_i32_0 = arith.constant 0 : i32
    %c0_i32_1 = arith.constant 0 : i32
    %c0_i32_2 = arith.constant 0 : i32
    return %c0_i32, %c0_i32_0, %c0_i32_1 : i32, i32, i32
  }
  func.func @transform_5(%arg0: i32) -> (i32, i32) {
    %c0_i32 = arith.constant 0 : i32
    %c0_i32_0 = arith.constant 0 : i32
    return %arg0, %c0_i32 : i32, i32
  }
  func.func @transform_6(%arg0: i32) -> (i32, i32) {
    %c0_i32 = arith.constant 0 : i32
    %c0_i32_0 = arith.constant 0 : i32
    return %arg0, %c0_i32 : i32, i32
  }
}

</mosaic_0001>

<llo_original>
// kernel: tpu_custom_call.1
$region0: #{tpu_custom_call.1}
  #allocation0 [shape = 'u32[]', space=smem, size = 0x4, offset = 0x4, fixed_abs, tag = 'smem constant byte address 0x4 - core index']
  #allocation1 [shape = 'u32[144,128]{1,0:T(1,128)}', space=vmem, size = 0x12000, scoped, tag = 'internal scratch']
  %s0 = inlined_call_operand.vmem [shape: f32[16,4], index: 0, kind: input, shape index: {}]
  %s1 = inlined_call_operand.vmem [shape: f32[2,4,256], index: 1, kind: input, shape index: {}]
  %s2 = inlined_call_operand.vmem [shape: f32[2,1,256], index: 2, kind: input, shape index: {}]
  %s3 = inlined_call_operand.hbm [shape: f32[2,256,128], index: 3, kind: input, shape index: {}]
  %s4 = inlined_call_operand.vmem [shape: f32[2,1,128], index: 4, kind: input, shape index: {}]
  %s5 = inlined_call_operand.hbm [shape: f32[16,128], index: 5, kind: input, shape index: {}]
  %s6 = inlined_call_operand.hbm [shape: f32[16,128], index: 6, kind: output, shape index: {}]
  %s7 = sld [smem:[#allocation0]]
  $region65: #{tpu_custom_call.1} parent=0
    _
  %s9 = ssub.s32 1, %s7
  %s10 = scalar_select 0, %s9, %s7
  $region1: #{tpu_custom_call.1} parent=0
    #allocation2 [shape = 'u8[262144]{0}', space=vmem, size = 0x40000, scoped, tag = 'input window, operand 3, single buffered']
    #allocation3 [shape = 's32[2]{0}', space=sflag, size = 0x8, scoped, tag = 'scoped memory for tpu_custom_call.1']
    #allocation4 [shape = 's32[2]{0}', space=sflag, size = 0x8, scoped, tag = 'scoped memory for tpu_custom_call.1']
    #allocation5 [shape = 'u8[8192]{0}', space=vmem, size = 0x2000, scoped, tag = 'input window, operand 5']
    #allocation6 [shape = 's32[2]{0}', space=sflag, size = 0x8, scoped, tag = 'scoped memory for tpu_custom_call.1']
    #allocation7 [shape = 'u8[8192]{0}', space=vmem, size = 0x2000, scoped, tag = 'output window, operand 0']
    %11 = vsyncpa [#allocation3], 0
    %12 = vsyncpa [#allocation6], 0
    %s13 = scalar_lea.sflag [#allocation6], 1
    %14 = vsyncpa %s13, 0
    %15 = vsyncpa [#allocation4], 0
    %s16 = scalar_lea.sflag [#allocation4], 1
    %17 = vsyncpa %s16, 0
    loop: start=0, step=1, limit=4
    $region2: #{tpu_custom_call.1} parent=1 // loop_pre_header
      _
    $region3: #{tpu_custom_call.1} parent=1 // loop_header
      %s19 = sphi 0, %s23
      %p20 = scmp.ge.s32.totalorder %s19, 4
      %s29 = sphi 0, %s31
      %s32 = sphi 0, %s29
      %s33 = sphi 0, %s32
      %s49 = sphi 0, %s33
      %s53 = sphi 0, %s53
      %s55 = sphi 0, %s53
      %s56 = sphi 0, %s55
      %s70 = sphi 0, %s56
      %s74 = sphi 0, %s74
      %s76 = sphi 0, %s74
      %s77 = sphi 0, %s76
      %s91 = sphi 0, %s77
      %s95 = sphi 0, %s95
      %s97 = sphi 0, %s95
      %s98 = sphi 0, %s97
      %s112 = sphi 0, %s98
      %s116 = sphi 0, %s116
      %s118 = sphi 0, %s116
      %s119 = sphi 0, %s118
      %s133 = sphi 0, %s119
      %s139 = sphi 0, %s141
      %s142 = sphi 0, %s139
      %s143 = sphi 0, %s142
      %s159 = sphi 0, %s143
      %s165 = sphi 0, %s167
      %s168 = sphi 0, %s165
      %s169 = sphi 0, %s168
      %s185 = sphi 0, %s169
    $region4: #{tpu_custom_call.1} parent=1 // loop_header_branch
      %22 = sbr.rel (%p20) target = $region8
    $region5: #{tpu_custom_call.1} parent=1 // loop_body
      %s24 = ssub.s32 %s19, 1
      %s25 = ssub.s32 %s19, 2
      %s26 = sadd.s32 %s19, 1
      %s27 = ssub.s32 %s19, %s26
      %p28 = scmp.eq.s32.totalorder %s27, 0
      %s30 = sadd.s32 %s29, 1
      %s31 = scalar_select %p28, %s29, %s30
      %p34 = pneg %p28
      %p35 = scmp.eq.s32.totalorder %s19, 1
      %p36 = por %p34, %p35
      %p37 = scmp.ne.s32.totalorder %s29, %s32
      %p38 = scmp.eq.s32.totalorder %s19, 0
      %p39 = por %p37, %p38
      %p40 = scmp.ne.s32.totalorder %s29, %s32
      %p41 = scmp.eq.s32.totalorder %s24, 1
      %p42 = por %p40, %p41
      %p43 = scmp.ne.s32.totalorder %s32, %s33
      %p44 = scmp.eq.s32.totalorder %s24, 0
      %p45 = por %p43, %p44
      %p46 = scmp.ne.s32.totalorder %s32, %s33
      %p47 = scmp.eq.s32.totalorder %s25, 1
      %p48 = por %p46, %p47
      %p50 = scmp.ne.s32.totalorder %s33, %s49
      %p51 = scmp.eq.s32.totalorder %s25, 0
      %p52 = por %p50, %p51
      %s54 = sadd.s32 %s53, 1
      %p57 = scmp.eq.s32.totalorder %s19, 1
      %p58 = scmp.ne.s32.totalorder %s53, %s55
      %p59 = scmp.eq.s32.totalorder %s19, 0
      %p60 = por %p58, %p59
      %p61 = scmp.ne.s32.totalorder %s53, %s55
      %p62 = scmp.eq.s32.totalorder %s24, 1
      %p63 = por %p61, %p62
      %p64 = scmp.ne.s32.totalorder %s55, %s56
      %p65 = scmp.eq.s32.totalorder %s24, 0
      %p66 = por %p64, %p65
      %p67 = scmp.ne.s32.totalorder %s55, %s56
      %p68 = scmp.eq.s32.totalorder %s25, 1
      %p69 = por %p67, %p68
      %p71 = scmp.ne.s32.totalorder %s56, %s70
      %p72 = scmp.eq.s32.totalorder %s25, 0
      %p73 = por %p71, %p72
      %s75 = sadd.s32 %s74, 1
      %p78 = scmp.eq.s32.totalorder %s19, 1
      %p79 = scmp.ne.s32.totalorder %s74, %s76
      %p80 = scmp.eq.s32.totalorder %s19, 0
      %p81 = por %p79, %p80
      %p82 = scmp.ne.s32.totalorder %s74, %s76
      %p83 = scmp.eq.s32.totalorder %s24, 1
      %p84 = por %p82, %p83
      %p85 = scmp.ne.s32.totalorder %s76, %s77
      %p86 = scmp.eq.s32.totalorder %s24, 0
      %p87 = por %p85, %p86
      %p88 = scmp.ne.s32.totalorder %s76, %s77
      %p89 = scmp.eq.s32.totalorder %s25, 1
      %p90 = por %p88, %p89
      %p92 = scmp.ne.s32.totalorder %s77, %s91
      %p93 = scmp.eq.s32.totalorder %s25, 0
      %p94 = por %p92, %p93
      %s96 = sadd.s32 %s95, 1
      %p99 = scmp.eq.s32.totalorder %s19, 1
      %p100 = scmp.ne.s32.totalorder %s95, %s97
      %p101 = scmp.eq.s32.totalorder %s19, 0
      %p102 = por %p100, %p101
      %p103 = scmp.ne.s32.totalorder %s95, %s97
      %p104 = scmp.eq.s32.totalorder %s24, 1
      %p105 = por %p103, %p104
      %p106 = scmp.ne.s32.totalorder %s97, %s98
      %p107 = scmp.eq.s32.totalorder %s24, 0
      %p108 = por %p106, %p107
      %p109 = scmp.ne.s32.totalorder %s97, %s98
      %p110 = scmp.eq.s32.totalorder %s25, 1
      %p111 = por %p109, %p110
      %p113 = scmp.ne.s32.totalorder %s98, %s112
      %p114 = scmp.eq.s32.totalorder %s25, 0
      %p115 = por %p113, %p114
      %s117 = sadd.s32 %s116, 1
      %p120 = scmp.eq.s32.totalorder %s19, 1
      %p121 = scmp.ne.s32.totalorder %s116, %s118
      %p122 = scmp.eq.s32.totalorder %s19, 0
      %p123 = por %p121, %p122
      %p124 = scmp.ne.s32.totalorder %s116, %s118
      %p125 = scmp.eq.s32.totalorder %s24, 1
      %p126 = por %p124, %p125
      %p127 = scmp.ne.s32.totalorder %s118, %s119
      %p128 = scmp.eq.s32.totalorder %s24, 0
      %p129 = por %p127, %p128
      %p130 = scmp.ne.s32.totalorder %s118, %s119
      %p131 = scmp.eq.s32.totalorder %s25, 1
      %p132 = por %p130, %p131
      %p134 = scmp.ne.s32.totalorder %s119, %s133
      %p135 = scmp.eq.s32.totalorder %s25, 0
      %p136 = por %p134, %p135
      %s137 = ssub.s32 %s19, %s26
      %p138 = scmp.eq.s32.totalorder %s137, 0
      %s140 = sadd.s32 %s139, 1
      %s141 = scalar_select %p138, %s139, %s140
      %p144 = pneg %p138
      %p145 = scmp.eq.s32.totalorder %s19, 1
      %p146 = por %p144, %p145
      %p147 = scmp.ne.s32.totalorder %s139, %s142
      %p148 = scmp.eq.s32.totalorder %s19, 0
      %p149 = por %p147, %p148
      %p150 = scmp.ne.s32.totalorder %s139, %s142
      %p151 = scmp.eq.s32.totalorder %s24, 1
      %p152 = por %p150, %p151
      %p153 = scmp.ne.s32.totalorder %s142, %s143
      %p154 = scmp.eq.s32.totalorder %s24, 0
      %p155 = por %p153, %p154
      %p156 = scmp.ne.s32.totalorder %s142, %s143
      %p157 = scmp.eq.s32.totalorder %s25, 1
      %p158 = por %p156, %p157
      %p160 = scmp.ne.s32.totalorder %s143, %s159
      %p161 = scmp.eq.s32.totalorder %s25, 0
      %p162 = por %p160, %p161
      %s163 = ssub.s32 %s19, %s26
      %p164 = scmp.eq.s32.totalorder %s163, 0
      %s166 = sadd.s32 %s165, 1
      %s167 = scalar_select %p164, %s165, %s166
      %p170 = pneg %p164
      %p171 = scmp.eq.s32.totalorder %s19, 1
      %p172 = por %p170, %p171
      %p173 = scmp.ne.s32.totalorder %s165, %s168
      %p174 = scmp.eq.s32.totalorder %s19, 0
      %p175 = por %p173, %p174
      %p176 = scmp.ne.s32.totalorder %s165, %s168
      %p177 = scmp.eq.s32.totalorder %s24, 1
      %p178 = por %p176, %p177
      %p179 = scmp.ne.s32.totalorder %s168, %s169
      %p180 = scmp.eq.s32.totalorder %s24, 0
      %p181 = por %p179, %p180
      %p182 = scmp.ne.s32.totalorder %s168, %s169
      %p183 = scmp.eq.s32.totalorder %s25, 1
      %p184 = por %p182, %p183
      %p186 = scmp.ne.s32.totalorder %s169, %s185
      %p187 = scmp.eq.s32.totalorder %s25, 0
      %p188 = por %p186, %p187
      %p189 = scmp.le.s32.totalorder 1, %s19
      %p190 = scmp.lt.s32.totalorder %s19, 3
      %p191 = pnand %p189, %p190
      %p192 = pneg %p191
      // Predicated region
      $region9: #{tpu_custom_call.1} parent=5 // pred_check
        _
      $region10: #{tpu_custom_call.1} parent=5 // pred_check_branch
        %194 = sbr.rel (%p191) target = $region12
      $region11: #{tpu_custom_call.1} parent=5 // pred_region
        %s195 = ssub.s32 %s19, 1
        // Predicated region
        $region13: #{tpu_custom_call.1} parent=11 // pred_check
          %p196 = pneg %p66
        $region14: #{tpu_custom_call.1} parent=11 // pred_check_branch
          %198 = sbr.rel (%p196) target = $region16
        $region15: #{tpu_custom_call.1} parent=11 // pred_region
          _
        $region16: #{tpu_custom_call.1} parent=11 // pred_fallthru
          _
        // Predicated region
        $region17: #{tpu_custom_call.1} parent=11 // pred_check
          %p199 = pneg %p87
        $region18: #{tpu_custom_call.1} parent=11 // pred_check_branch
          %201 = sbr.rel (%p199) target = $region20
        $region19: #{tpu_custom_call.1} parent=11 // pred_region
          _
        $region20: #{tpu_custom_call.1} parent=11 // pred_fallthru
          _
        // Predicated region
        $region21: #{tpu_custom_call.1} parent=11 // pred_check
          %p202 = pneg %p108
        $region22: #{tpu_custom_call.1} parent=11 // pred_check_branch
          %204 = sbr.rel (%p202) target = $region24
        $region23: #{tpu_custom_call.1} parent=11 // pred_region
          %s206 = ssub.s32 8192, 8192
          %207 = vsyncadd [#allocation3], %s206
          %s208 = sshll.u32 [#allocation2], 4
          %s209 = int_to_ptr.vmem [resolvable:$true] %s208
          %214 = dma.hbm_to_vmem [thread:$0]  %s3, 8192, %s209, [#allocation3], 128, 128, 8
        $region24: #{tpu_custom_call.1} parent=11 // pred_fallthru
          _
        // Predicated region
        $region25: #{tpu_custom_call.1} parent=11 // pred_check
          %p215 = pneg %p129
        $region26: #{tpu_custom_call.1} parent=11 // pred_check_branch
          %217 = sbr.rel (%p215) target = $region28
        $region27: #{tpu_custom_call.1} parent=11 // pred_region
          _
        $region28: #{tpu_custom_call.1} parent=11 // pred_fallthru
          _
      $region12: #{tpu_custom_call.1} parent=5 // pred_fallthru
        _
      %p218 = scmp.lt.s32.totalorder %s19, 2
      // Predicated region
      $region29: #{tpu_custom_call.1} parent=5 // pred_check
        %p219 = pneg %p218
      $region30: #{tpu_custom_call.1} parent=5 // pred_check_branch
        %221 = sbr.rel (%p219) target = $region32
      $region31: #{tpu_custom_call.1} parent=5 // pred_region
        // Predicated region
        $region33: #{tpu_custom_call.1} parent=31 // pred_check
          %p222 = pneg %p39
        $region34: #{tpu_custom_call.1} parent=31 // pred_check_branch
          %224 = sbr.rel (%p222) target = $region36
        $region35: #{tpu_custom_call.1} parent=31 // pred_region
          %p225 = scmp.lt.s32.totalorder %s19, 1
          %s226 = scalar_select %p225, %s19, 1
          %s227 = smul.addr %s226, 8
          %s228 = scalar_lea.vmem %s0, %s227
        $region36: #{tpu_custom_call.1} parent=31 // pred_fallthru
          _
        // Predicated region
        $region37: #{tpu_custom_call.1} parent=31 // pred_check
          %p229 = pneg %p149
        $region38: #{tpu_custom_call.1} parent=31 // pred_check_branch
          %231 = sbr.rel (%p229) target = $region40
        $region39: #{tpu_custom_call.1} parent=31 // pred_region
          %s232 = sand.u32 %s139, 1
          %s233 = scalar_lea.sflag [#allocation6], %s232
          %s234 = sand.u32 %s139, 1
          %s235 = smul.addr %s234, 8
          %s236 = scalar_lea.vmem [#allocation5], %s235
          %s238 = ssub.s32 128, 128
          %239 = vsyncadd %s233, %s238
          %s240 = smul.addr %s19, 128
          %s241 = scalar_lea.hbm %s5, %s240
          %s243 = sshll.u32 %s236, 4
          %s244 = int_to_ptr.vmem [resolvable:$true] %s243
          %246 = dma.hbm_to_vmem [thread:$0]  %s241, 128, %s244, %s233
        $region40: #{tpu_custom_call.1} parent=31 // pred_fallthru
          _
      $region32: #{tpu_custom_call.1} parent=5 // pred_fallthru
        _
      %p247 = scmp.le.s32.totalorder 1, %s19
      %p248 = scmp.lt.s32.totalorder %s19, 3
      %p249 = pnand %p247, %p248
      %p250 = pneg %p249
      // Predicated region
      $region41: #{tpu_custom_call.1} parent=5 // pred_check
        _
      $region42: #{tpu_custom_call.1} parent=5 // pred_check_branch
        %252 = sbr.rel (%p249) target = $region44
      $region43: #{tpu_custom_call.1} parent=5 // pred_region
        %s253 = ssub.s32 %s19, 1
        // Predicated region
        $region45: #{tpu_custom_call.1} parent=43 // pred_check
          %p254 = pneg %p108
        $region46: #{tpu_custom_call.1} parent=43 // pred_check_branch
          %256 = sbr.rel (%p254) target = $region48
        $region47: #{tpu_custom_call.1} parent=43 // pred_region
          %257 = dma.done [#allocation3], 8192
        $region48: #{tpu_custom_call.1} parent=43 // pred_fallthru
          _
        %s258 = sand.u32 %s142, 1
        %s259 = scalar_lea.sflag [#allocation6], %s258
        %s260 = sand.u32 %s142, 1
        %s261 = smul.addr %s260, 8
        %s262 = scalar_lea.vmem [#allocation5], %s261
        // Predicated region
        $region49: #{tpu_custom_call.1} parent=43 // pred_check
          %p263 = pneg %p155
        $region50: #{tpu_custom_call.1} parent=43 // pred_check_branch
          %265 = sbr.rel (%p263) target = $region52
        $region51: #{tpu_custom_call.1} parent=43 // pred_region
          %266 = dma.done %s259, 128
        $region52: #{tpu_custom_call.1} parent=43 // pred_fallthru
          _
        %p267 = scmp.lt.s32.totalorder %s24, 1
        %s268 = scalar_select %p267, %s24, 1
        %s269 = smul.addr %s268, 8
        %s270 = scalar_lea.vmem %s0, %s269
        %p271 = pneg %p45
        %p272 = pneg %p42
        %p273 = pneg %p66
        %p274 = pneg %p63
        %p275 = pneg %p87
        %p276 = pneg %p84
        %p277 = pneg %p108
        %p278 = pneg %p105
        %p279 = pneg %p129
        %p280 = pneg %p126
        %s281 = sand.u32 %s142, 1
        %s282 = scalar_lea.sflag [#allocation6], %s281
        %s283 = sand.u32 %s142, 1
        %s284 = smul.addr %s283, 8
        %s285 = scalar_lea.vmem [#allocation5], %s284
        %p286 = pneg %p155
        %p287 = pneg %p152
        %p288 = pneg %p181
        %p289 = pneg %p178
        %s290 = sand.u32 %s168, 1
        %s291 = scalar_lea.sflag [#allocation4], %s290
        %s292 = sand.u32 %s168, 1
        %s293 = smul.addr %s292, 8
        %s294 = scalar_lea.vmem [#allocation7], %s293
        %p295 = scmp.lt.s32.totalorder %s24, 1
        %s296 = scalar_select %p295, %s24, 1
        %s297 = smul.addr %s296, 8
        %s298 = scalar_lea.vmem %s0, %s297
        %v299 = vld [vmem:[%s298] sm:$0xff]
        %v300 = vld [vmem:[%s262] sm:$0xff]
        %v301 = vld [vmem:[%s1] sm:$0xff]
        %v302 = vld [vmem:[%s2] sm:$0x3]
        %v304 = vlaneseq
        %v305 = vshrl.u32 %v304, 7
        %v306 = vsub.s32 0, %v305
        %v307 = vrot.slane %v302, %v306
        %v308 = vlaneseq
        %v309 = vshrl.u32 %v308, 7
        %v310 = vsub.s32 1, %v309
        %v311 = vrot.slane %v302, %v310
        %v315 = vcombine.high %v301, %v301
        %vm316 = vcmask 31744
        %v318 = vsel %vm316, %v299, 0
        %vm320 = vcmask 1043456
        %v321 = vsel %vm320, %v301, 0
        %v323 = vsel %vm320, %v315, 0
        %325 = vmatprep.subr.mxu0 0.0
        %326 = vmatpush1.msra.mxu0 0.0
        %327 = vmatprep.subr.mxu0 0.0
        %328 = vmatpush1.msra.mxu0 0.0
        %329 = vmatprep.subr.mxu0 0.0
        %330 = vmatpush1.msra.mxu0 0.0
        %331 = vmatprep.subr.mxu0 0.0
        %332 = vmatpush1.msra.mxu0 0.0
        %333 = vmatprep.subr.mxu0 0.0
        %334 = vmatpush1.msra.mxu0 0.0
        %335 = vmatprep.subr.mxu0 0.0
        %336 = vmatpush1.msra.mxu0 0.0
        %337 = vmatprep.subr.mxu0 0.0
        %338 = vmatpush1.msra.mxu0 0.0
        %339 = vmatprep.subr.mxu0 0.0
        %340 = vmatpush1.msra.mxu0 0.0
        %341 = vmatprep.subr.mxu0 0.0
        %342 = vmatpush1.msra.mxu0 0.0
        %343 = vmatprep.subr.mxu0 0.0
        %344 = vmatpush1.msra.mxu0 0.0
        %345 = vmatprep.subr.mxu0 0.0
        %346 = vmatpush1.msra.mxu0 0.0
        %347 = vmatprep.subr.mxu0 0.0
        %348 = vmatpush1.msra.mxu0 0.0
        %349 = vmatprep.subr.mxu0 0.0
        %350 = vmatpush1.msra.mxu0 0.0
        %351 = vmatprep.subr.mxu0 0.0
        %352 = vmatpush1.msra.mxu0 0.0
        %353 = vmatprep.subr.mxu0 0.0
        %354 = vmatpush1.msra.mxu0 0.0
        %355 = vmatprep.subr.mxu0 %v323
        %356 = vmatpush1.msra.mxu0 %v321
        %357 = vmatprep.subr.mxu0 0.0
        %358 = vmatpush2.msra.mxu0 0.0
        %359 = vmatprep.subr.mxu0 0.0
        %360 = vmatpush2.msra.mxu0 0.0
        %361 = vmatprep.subr.mxu0 0.0
        %362 = vmatpush2.msra.mxu0 0.0
        %363 = vmatprep.subr.mxu0 0.0
        %364 = vmatpush2.msra.mxu0 0.0
        %365 = vmatprep.subr.mxu0 0.0
        %366 = vmatpush2.msra.mxu0 0.0
        %367 = vmatprep.subr.mxu0 0.0
        %368 = vmatpush2.msra.mxu0 0.0
        %369 = vmatprep.subr.mxu0 0.0
        %370 = vmatpush2.msra.mxu0 0.0
        %371 = vmatprep.subr.mxu0 0.0
        %372 = vmatpush2.msra.mxu0 0.0
        %373 = vmatprep.subr.mxu0 0.0
        %374 = vmatpush2.msra.mxu0 0.0
        %375 = vmatprep.subr.mxu0 0.0
        %376 = vmatpush2.msra.mxu0 0.0
        %377 = vmatprep.subr.mxu0 0.0
        %378 = vmatpush2.msra.mxu0 0.0
        %379 = vmatprep.subr.mxu0 0.0
        %380 = vmatpush2.msra.mxu0 0.0
        %381 = vmatprep.subr.mxu0 0.0
        %382 = vmatpush2.msra.mxu0 0.0
        %383 = vmatprep.subr.mxu0 0.0
        %384 = vmatpush2.msra.mxu0 0.0
        %385 = vmatprep.subr.mxu0 0.0
        %386 = vmatpush2.msra.mxu0 0.0
        %387 = vmatprep.subr.mxu0 0.0
        %388 = vmatpush2.msra.mxu0 0.0
        %389 = vmatprep.mubr.f32.mxu0 0.0
        %390 = vmatmul.mubr.f32.gmra.mxu0 %v318
        %v391 = vpop.f32.mrf.mxu0
        %v392 = vadd.f32 %v307, %v391
        %v393 = vpop.f32.mrf.mxu0
        %v394 = vadd.f32 %v311, %v393
        %395 = vdwg.mxu0
        %v396 = vmax.f32 %v392, 0.0
        %v397 = vmax.f32 %v394, 0.0
        %v398 = vand.u32 2147483647, %v392
        %v399 = vand.u32 2147483647, %v394
        %v400 = vsub.f32 0.0, %v398
        %v401 = vsub.f32 0.0, %v399
        %v402 = vmul.f32 %v400, 1.442695
        %v403 = vpow.pop %v402
        %v404 = vmul.f32 %v401, 1.442695
        %v405 = vpow.pop %v404
        %v406 = vadd.f32 %v403, 1.0
        %v407 = vlog2.pop %v406
        %v408 = vmul.f32 %v407, 0.6931472
        %v409 = vmul.f32 -0.5, %v403
        %v410 = vadd.f32 %v409, 1.0
        %v411 = vmul.f32 %v410, %v403
        %v412 = vand.u32 2147483647, %v403
        %vm413 = vcmp.lt.f32.partialorder %v412, 0.0004427343
        %v414 = vsel %vm413, %v411, %v408
        %v415 = vadd.f32 %v405, 1.0
        %v416 = vlog2.pop %v415
        %v417 = vmul.f32 %v416, 0.6931472
        %v418 = vmul.f32 -0.5, %v405
        %v419 = vadd.f32 %v418, 1.0
        %v420 = vmul.f32 %v419, %v405
        %v421 = vand.u32 2147483647, %v405
        %vm422 = vcmp.lt.f32.partialorder %v421, 0.0004427343
        %v423 = vsel %vm422, %v420, %v417
        %v424 = vadd.f32 %v396, %v414
        %v425 = vadd.f32 %v397, %v423
        %v426 = vld [vmem:[#allocation2] sm:$0xff]
        %v427 = vld [vmem:[#allocation2 + $0x8] sm:$0xff]
        %v428 = vld [vmem:[#allocation2 + $0x10] sm:$0xff]
        %v429 = vld [vmem:[#allocation2 + $0x18] sm:$0xff]
        %v430 = vld [vmem:[#allocation2 + $0x20] sm:$0xff]
        %v431 = vld [vmem:[#allocation2 + $0x28] sm:$0xff]
        %v432 = vld [vmem:[#allocation2 + $0x30] sm:$0xff]
        %v433 = vld [vmem:[#allocation2 + $0x38] sm:$0xff]
        %v434 = vld [vmem:[#allocation2 + $0x40] sm:$0xff]
        %v435 = vld [vmem:[#allocation2 + $0x48] sm:$0xff]
        %v436 = vld [vmem:[#allocation2 + $0x50] sm:$0xff]
        %v437 = vld [vmem:[#allocation2 + $0x58] sm:$0xff]
        %v438 = vld [vmem:[#allocation2 + $0x60] sm:$0xff]
        %v439 = vld [vmem:[#allocation2 + $0x68] sm:$0xff]
        %v440 = vld [vmem:[#allocation2 + $0x70] sm:$0xff]
        %v441 = vld [vmem:[#allocation2 + $0x78] sm:$0xff]
        %v442 = vld [vmem:[#allocation2 + $0x80] sm:$0xff]
        %v443 = vld [vmem:[#allocation2 + $0x88] sm:$0xff]
        %v444 = vld [vmem:[#allocation2 + $0x90] sm:$0xff]
        %v445 = vld [vmem:[#allocation2 + $0x98] sm:$0xff]
        %v446 = vld [vmem:[#allocation2 + $0xa0] sm:$0xff]
        %v447 = vld [vmem:[#allocation2 + $0xa8] sm:$0xff]
        %v448 = vld [vmem:[#allocation2 + $0xb0] sm:$0xff]
        %v449 = vld [vmem:[#allocation2 + $0xb8] sm:$0xff]
        %v450 = vld [vmem:[#allocation2 + $0xc0] sm:$0xff]
        %v451 = vld [vmem:[#allocation2 + $0xc8] sm:$0xff]
        %v452 = vld [vmem:[#allocation2 + $0xd0] sm:$0xff]
        %v453 = vld [vmem:[#allocation2 + $0xd8] sm:$0xff]
        %v454 = vld [vmem:[#allocation2 + $0xe0] sm:$0xff]
        %v455 = vld [vmem:[#allocation2 + $0xe8] sm:$0xff]
        %v456 = vld [vmem:[#allocation2 + $0xf0] sm:$0xff]
        %v457 = vld [vmem:[#allocation2 + $0xf8] sm:$0xff]
        %v458 = vld [vmem:[%s4] sm:$0x1]
        %v460 = vlaneseq
        %v461 = vshrl.u32 %v460, 7
        %v462 = vsub.s32 0, %v461
        %v463 = vrot.slane %v458, %v462
        %465 = vmatprep.subr.mxu0 0.0
        %466 = vmatpush1.msra.mxu0 %v441
        %467 = vmatprep.subr.mxu0 0.0
        %468 = vmatpush1.msra.mxu0 %v440
        %469 = vmatprep.subr.mxu0 0.0
        %470 = vmatpush1.msra.mxu0 %v439
        %471 = vmatprep.subr.mxu0 0.0
        %472 = vmatpush1.msra.mxu0 %v438
        %473 = vmatprep.subr.mxu0 0.0
        %474 = vmatpush1.msra.mxu0 %v437
        %475 = vmatprep.subr.mxu0 0.0
        %476 = vmatpush1.msra.mxu0 %v436
        %477 = vmatprep.subr.mxu0 0.0
        %478 = vmatpush1.msra.mxu0 %v435
        %479 = vmatprep.subr.mxu0 0.0
        %480 = vmatpush1.msra.mxu0 %v434
        %481 = vmatprep.subr.mxu0 0.0
        %482 = vmatpush1.msra.mxu0 %v433
        %483 = vmatprep.subr.mxu0 0.0
        %484 = vmatpush1.msra.mxu0 %v432
        %485 = vmatprep.subr.mxu0 0.0
        %486 = vmatpush1.msra.mxu0 %v431
        %487 = vmatprep.subr.mxu0 0.0
        %488 = vmatpush1.msra.mxu0 %v430
        %489 = vmatprep.subr.mxu0 0.0
        %490 = vmatpush1.msra.mxu0 %v429
        %491 = vmatprep.subr.mxu0 0.0
        %492 = vmatpush1.msra.mxu0 %v428
        %493 = vmatprep.subr.mxu0 0.0
        %494 = vmatpush1.msra.mxu0 %v427
        %495 = vmatprep.subr.mxu0 0.0
        %496 = vmatpush1.msra.mxu0 %v426
        %497 = vmatprep.subr.mxu0 0.0
        %498 = vmatpush2.msra.mxu0 %v457
        %499 = vmatprep.subr.mxu0 0.0
        %500 = vmatpush2.msra.mxu0 %v456
        %501 = vmatprep.subr.mxu0 0.0
        %502 = vmatpush2.msra.mxu0 %v455
        %503 = vmatprep.subr.mxu0 0.0
        %504 = vmatpush2.msra.mxu0 %v454
        %505 = vmatprep.subr.mxu0 0.0
        %506 = vmatpush2.msra.mxu0 %v453
        %507 = vmatprep.subr.mxu0 0.0
        %508 = vmatpush2.msra.mxu0 %v452
        %509 = vmatprep.subr.mxu0 0.0
        %510 = vmatpush2.msra.mxu0 %v451
        %511 = vmatprep.subr.mxu0 0.0
        %512 = vmatpush2.msra.mxu0 %v450
        %513 = vmatprep.subr.mxu0 0.0
        %514 = vmatpush2.msra.mxu0 %v449
        %515 = vmatprep.subr.mxu0 0.0
        %516 = vmatpush2.msra.mxu0 %v448
        %517 = vmatprep.subr.mxu0 0.0
        %518 = vmatpush2.msra.mxu0 %v447
        %519 = vmatprep.subr.mxu0 0.0
        %520 = vmatpush2.msra.mxu0 %v446
        %521 = vmatprep.subr.mxu0 0.0
        %522 = vmatpush2.msra.mxu0 %v445
        %523 = vmatprep.subr.mxu0 0.0
        %524 = vmatpush2.msra.mxu0 %v444
        %525 = vmatprep.subr.mxu0 0.0
        %526 = vmatpush2.msra.mxu0 %v443
        %527 = vmatprep.subr.mxu0 0.0
        %528 = vmatpush2.msra.mxu0 %v442
        %529 = vmatprep.mubr.f32.mxu0 %v425
        %530 = vmatmul.mubr.f32.gmra.mxu0 %v424
        %v531 = vpop.f32.mrf.mxu0
        %v532 = vadd.f32 %v463, %v531
        %v533 = vpop.f32.mrf.mxu0
        %534 = vdwg.mxu0
        %v535 = vmax.f32 %v532, 0.0
        %v536 = vand.u32 2147483647, %v532
        %v537 = vsub.f32 0.0, %v536
        %v538 = vmul.f32 %v537, 1.442695
        %v539 = vpow.pop %v538
        %v540 = vadd.f32 %v539, 1.0
        %v541 = vlog2.pop %v540
        %v542 = vmul.f32 %v541, 0.6931472
        %v543 = vmul.f32 -0.5, %v539
        %v544 = vadd.f32 %v543, 1.0
        %v545 = vmul.f32 %v544, %v539
        %v546 = vand.u32 2147483647, %v539
        %vm547 = vcmp.lt.f32.partialorder %v546, 0.0004427343
        %v548 = vsel %vm547, %v545, %v542
        %v549 = vadd.f32 %v535, %v548
        %v550 = vmul.f32 %v300, %v549
        %v551 = vmul.f32 %v550, 0.5
        %v552 = vtanh.pop %v551
        %v553 = vadd.f32 %v552, 1.0
        %v554 = vmul.f32 %v553, 0.5
        %v555 = vmul.f32 %v300, %v554
        %s556 = scalar_lea.vmem %s1, 8
        %v557 = vld [vmem:[%s556] sm:$0xff]
        %s558 = scalar_lea.vmem %s2, 2
        %v559 = vld [vmem:[%s558] sm:$0x3]
        %v561 = vlaneseq
        %v562 = vshrl.u32 %v561, 7
        %v563 = vsub.s32 0, %v562
        %v564 = vrot.slane %v559, %v563
        %v565 = vlaneseq
        %v566 = vshrl.u32 %v565, 7
        %v567 = vsub.s32 1, %v566
        %v568 = vrot.slane %v559, %v567
        %v572 = vcombine.high %v557, %v557
        %v573 = vsel %vm320, %v557, 0
        %v575 = vsel %vm320, %v572, 0
        %577 = vmatprep.subr.mxu0 0.0
        %578 = vmatpush1.msra.mxu0 0.0
        %579 = vmatprep.subr.mxu0 0.0
        %580 = vmatpush1.msra.mxu0 0.0
        %581 = vmatprep.subr.mxu0 0.0
        %582 = vmatpush1.msra.mxu0 0.0
        %583 = vmatprep.subr.mxu0 0.0
        %584 = vmatpush1.msra.mxu0 0.0
        %585 = vmatprep.subr.mxu0 0.0
        %586 = vmatpush1.msra.mxu0 0.0
        %587 = vmatprep.subr.mxu0 0.0
        %588 = vmatpush1.msra.mxu0 0.0
        %589 = vmatprep.subr.mxu0 0.0
        %590 = vmatpush1.msra.mxu0 0.0
        %591 = vmatprep.subr.mxu0 0.0
        %592 = vmatpush1.msra.mxu0 0.0
        %593 = vmatprep.subr.mxu0 0.0
        %594 = vmatpush1.msra.mxu0 0.0
        %595 = vmatprep.subr.mxu0 0.0
        %596 = vmatpush1.msra.mxu0 0.0
        %597 = vmatprep.subr.mxu0 0.0
        %598 = vmatpush1.msra.mxu0 0.0
        %599 = vmatprep.subr.mxu0 0.0
        %600 = vmatpush1.msra.mxu0 0.0
        %601 = vmatprep.subr.mxu0 0.0
        %602 = vmatpush1.msra.mxu0 0.0
        %603 = vmatprep.subr.mxu0 0.0
        %604 = vmatpush1.msra.mxu0 0.0
        %605 = vmatprep.subr.mxu0 0.0
        %606 = vmatpush1.msra.mxu0 0.0
        %607 = vmatprep.subr.mxu0 %v575
        %608 = vmatpush1.msra.mxu0 %v573
        %609 = vmatprep.subr.mxu0 0.0
        %610 = vmatpush2.msra.mxu0 0.0
        %611 = vmatprep.subr.mxu0 0.0
        %612 = vmatpush2.msra.mxu0 0.0
        %613 = vmatprep.subr.mxu0 0.0
        %614 = vmatpush2.msra.mxu0 0.0
        %615 = vmatprep.subr.mxu0 0.0
        %616 = vmatpush2.msra.mxu0 0.0
        %617 = vmatprep.subr.mxu0 0.0
        %618 = vmatpush2.msra.mxu0 0.0
        %619 = vmatprep.subr.mxu0 0.0
        %620 = vmatpush2.msra.mxu0 0.0
        %621 = vmatprep.subr.mxu0 0.0
        %622 = vmatpush2.msra.mxu0 0.0
        %623 = vmatprep.subr.mxu0 0.0
        %624 = vmatpush2.msra.mxu0 0.0
        %625 = vmatprep.subr.mxu0 0.0
        %626 = vmatpush2.msra.mxu0 0.0
        %627 = vmatprep.subr.mxu0 0.0
        %628 = vmatpush2.msra.mxu0 0.0
        %629 = vmatprep.subr.mxu0 0.0
        %630 = vmatpush2.msra.mxu0 0.0
        %631 = vmatprep.subr.mxu0 0.0
        %632 = vmatpush2.msra.mxu0 0.0
        %633 = vmatprep.subr.mxu0 0.0
        %634 = vmatpush2.msra.mxu0 0.0
        %635 = vmatprep.subr.mxu0 0.0
        %636 = vmatpush2.msra.mxu0 0.0
        %637 = vmatprep.subr.mxu0 0.0
        %638 = vmatpush2.msra.mxu0 0.0
        %639 = vmatprep.subr.mxu0 0.0
        %640 = vmatpush2.msra.mxu0 0.0
        %641 = vmatprep.mubr.f32.mxu0 0.0
        %642 = vmatmul.mubr.f32.gmra.mxu0 %v318
        %v643 = vpop.f32.mrf.mxu0
        %v644 = vadd.f32 %v564, %v643
        %v645 = vpop.f32.mrf.mxu0
        %v646 = vadd.f32 %v568, %v645
        %647 = vdwg.mxu0
        %v648 = vmax.f32 %v644, 0.0
        %v649 = vmax.f32 %v646, 0.0
        %v650 = vand.u32 2147483647, %v644
        %v651 = vand.u32 2147483647, %v646
        %v652 = vsub.f32 0.0, %v650
        %v653 = vsub.f32 0.0, %v651
        %v654 = vmul.f32 %v652, 1.442695
        %v655 = vpow.pop %v654
        %v656 = vmul.f32 %v653, 1.442695
        %v657 = vpow.pop %v656
        %v658 = vadd.f32 %v655, 1.0
        %v659 = vlog2.pop %v658
        %v660 = vmul.f32 %v659, 0.6931472
        %v661 = vmul.f32 -0.5, %v655
        %v662 = vadd.f32 %v661, 1.0
        %v663 = vmul.f32 %v662, %v655
        %v664 = vand.u32 2147483647, %v655
        %vm665 = vcmp.lt.f32.partialorder %v664, 0.0004427343
        %v666 = vsel %vm665, %v663, %v660
        %v667 = vadd.f32 %v657, 1.0
        %v668 = vlog2.pop %v667
        %v669 = vmul.f32 %v668, 0.6931472
        %v670 = vmul.f32 -0.5, %v657
        %v671 = vadd.f32 %v670, 1.0
        %v672 = vmul.f32 %v671, %v657
        %v673 = vand.u32 2147483647, %v657
        %vm674 = vcmp.lt.f32.partialorder %v673, 0.0004427343
        %v675 = vsel %vm674, %v672, %v669
        %v676 = vadd.f32 %v648, %v666
        %v677 = vadd.f32 %v649, %v675
        %s678 = scalar_lea.vmem [#allocation2], 256
        %v679 = vld [vmem:[%s678] sm:$0xff]
        %v680 = vld [vmem:[%s678 + $0x8] sm:$0xff]
        %v681 = vld [vmem:[%s678 + $0x10] sm:$0xff]
        %v682 = vld [vmem:[%s678 + $0x18] sm:$0xff]
        %v683 = vld [vmem:[%s678 + $0x20] sm:$0xff]
        %v684 = vld [vmem:[%s678 + $0x28] sm:$0xff]
        %v685 = vld [vmem:[%s678 + $0x30] sm:$0xff]
        %v686 = vld [vmem:[%s678 + $0x38] sm:$0xff]
        %v687 = vld [vmem:[%s678 + $0x40] sm:$0xff]
        %v688 = vld [vmem:[%s678 + $0x48] sm:$0xff]
        %v689 = vld [vmem:[%s678 + $0x50] sm:$0xff]
        %v690 = vld [vmem:[%s678 + $0x58] sm:$0xff]
        %v691 = vld [vmem:[%s678 + $0x60] sm:$0xff]
        %v692 = vld [vmem:[%s678 + $0x68] sm:$0xff]
        %v693 = vld [vmem:[%s678 + $0x70] sm:$0xff]
        %v694 = vld [vmem:[%s678 + $0x78] sm:$0xff]
        %v695 = vld [vmem:[%s678 + $0x80] sm:$0xff]
        %v696 = vld [vmem:[%s678 + $0x88] sm:$0xff]
        %v697 = vld [vmem:[%s678 + $0x90] sm:$0xff]
        %v698 = vld [vmem:[%s678 + $0x98] sm:$0xff]
        %v699 = vld [vmem:[%s678 + $0xa0] sm:$0xff]
        %v700 = vld [vmem:[%s678 + $0xa8] sm:$0xff]
        %v701 = vld [vmem:[%s678 + $0xb0] sm:$0xff]
        %v702 = vld [vmem:[%s678 + $0xb8] sm:$0xff]
        %v703 = vld [vmem:[%s678 + $0xc0] sm:$0xff]
        %v704 = vld [vmem:[%s678 + $0xc8] sm:$0xff]
        %v705 = vld [vmem:[%s678 + $0xd0] sm:$0xff]
        %v706 = vld [vmem:[%s678 + $0xd8] sm:$0xff]
        %v707 = vld [vmem:[%s678 + $0xe0] sm:$0xff]
        %v708 = vld [vmem:[%s678 + $0xe8] sm:$0xff]
        %v709 = vld [vmem:[%s678 + $0xf0] sm:$0xff]
        %v710 = vld [vmem:[%s678 + $0xf8] sm:$0xff]
        %s711 = scalar_lea.vmem %s4, 1
        %v712 = vld [vmem:[%s711] sm:$0x1]
        %v714 = vlaneseq
        %v715 = vshrl.u32 %v714, 7
        %v716 = vsub.s32 0, %v715
        %v717 = vrot.slane %v712, %v716
        %719 = vmatprep.subr.mxu0 0.0
        %720 = vmatpush1.msra.mxu0 %v694
        %721 = vmatprep.subr.mxu0 0.0
        %722 = vmatpush1.msra.mxu0 %v693
        %723 = vmatprep.subr.mxu0 0.0
        %724 = vmatpush1.msra.mxu0 %v692
        %725 = vmatprep.subr.mxu0 0.0
        %726 = vmatpush1.msra.mxu0 %v691
        %727 = vmatprep.subr.mxu0 0.0
        %728 = vmatpush1.msra.mxu0 %v690
        %729 = vmatprep.subr.mxu0 0.0
        %730 = vmatpush1.msra.mxu0 %v689
        %731 = vmatprep.subr.mxu0 0.0
        %732 = vmatpush1.msra.mxu0 %v688
        %733 = vmatprep.subr.mxu0 0.0
        %734 = vmatpush1.msra.mxu0 %v687
        %735 = vmatprep.subr.mxu0 0.0
        %736 = vmatpush1.msra.mxu0 %v686
        %737 = vmatprep.subr.mxu0 0.0
        %738 = vmatpush1.msra.mxu0 %v685
        %739 = vmatprep.subr.mxu0 0.0
        %740 = vmatpush1.msra.mxu0 %v684
        %741 = vmatprep.subr.mxu0 0.0
        %742 = vmatpush1.msra.mxu0 %v683
        %743 = vmatprep.subr.mxu0 0.0
        %744 = vmatpush1.msra.mxu0 %v682
        %745 = vmatprep.subr.mxu0 0.0
        %746 = vmatpush1.msra.mxu0 %v681
        %747 = vmatprep.subr.mxu0 0.0
        %748 = vmatpush1.msra.mxu0 %v680
        %749 = vmatprep.subr.mxu0 0.0
        %750 = vmatpush1.msra.mxu0 %v679
        %751 = vmatprep.subr.mxu0 0.0
        %752 = vmatpush2.msra.mxu0 %v710
        %753 = vmatprep.subr.mxu0 0.0
        %754 = vmatpush2.msra.mxu0 %v709
        %755 = vmatprep.subr.mxu0 0.0
        %756 = vmatpush2.msra.mxu0 %v708
        %757 = vmatprep.subr.mxu0 0.0
        %758 = vmatpush2.msra.mxu0 %v707
        %759 = vmatprep.subr.mxu0 0.0
        %760 = vmatpush2.msra.mxu0 %v706
        %761 = vmatprep.subr.mxu0 0.0
        %762 = vmatpush2.msra.mxu0 %v705
        %763 = vmatprep.subr.mxu0 0.0
        %764 = vmatpush2.msra.mxu0 %v704
        %765 = vmatprep.subr.mxu0 0.0
        %766 = vmatpush2.msra.mxu0 %v703
        %767 = vmatprep.subr.mxu0 0.0
        %768 = vmatpush2.msra.mxu0 %v702
        %769 = vmatprep.subr.mxu0 0.0
        %770 = vmatpush2.msra.mxu0 %v701
        %771 = vmatprep.subr.mxu0 0.0
        %772 = vmatpush2.msra.mxu0 %v700
        %773 = vmatprep.subr.mxu0 0.0
        %774 = vmatpush2.msra.mxu0 %v699
        %775 = vmatprep.subr.mxu0 0.0
        %776 = vmatpush2.msra.mxu0 %v698
        %777 = vmatprep.subr.mxu0 0.0
        %778 = vmatpush2.msra.mxu0 %v697
        %779 = vmatprep.subr.mxu0 0.0
        %780 = vmatpush2.msra.mxu0 %v696
        %781 = vmatprep.subr.mxu0 0.0
        %782 = vmatpush2.msra.mxu0 %v695
        %783 = vmatprep.mubr.f32.mxu0 %v677
        %784 = vmatmul.mubr.f32.gmra.mxu0 %v676
        %v785 = vpop.f32.mrf.mxu0
        %v786 = vadd.f32 %v717, %v785
        %v787 = vpop.f32.mrf.mxu0
        %788 = vdwg.mxu0
        %v789 = vmax.f32 %v786, 0.0
        %v790 = vand.u32 2147483647, %v786
        %v791 = vsub.f32 0.0, %v790
        %v792 = vmul.f32 %v791, 1.442695
        %v793 = vpow.pop %v792
        %v794 = vadd.f32 %v793, 1.0
        %v795 = vlog2.pop %v794
        %v796 = vmul.f32 %v795, 0.6931472
        %v797 = vmul.f32 -0.5, %v793
        %v798 = vadd.f32 %v797, 1.0
        %v799 = vmul.f32 %v798, %v793
        %v800 = vand.u32 2147483647, %v793
        %vm801 = vcmp.lt.f32.partialorder %v800, 0.0004427343
        %v802 = vsel %vm801, %v799, %v796
        %v803 = vadd.f32 %v789, %v802
        %v804 = vmul.f32 %v555, %v803
        %v805 = vmul.f32 %v804, 0.5
        %v806 = vtanh.pop %v805
        %v807 = vadd.f32 %v806, 1.0
        %v808 = vmul.f32 %v807, 0.5
        %v809 = vmul.f32 %v555, %v808
        %810 = vst [vmem:[%s294] sm:$0xff] %v809
        %s811 = sand.u32 %s168, 1
        %s812 = scalar_lea.sflag [#allocation4], %s811
        %s813 = sand.u32 %s168, 1
        %s814 = smul.addr %s813, 8
        %s815 = scalar_lea.vmem [#allocation7], %s814
        // Predicated region
        $region53: #{tpu_custom_call.1} parent=43 // pred_check
          %p816 = pneg %p178
        $region54: #{tpu_custom_call.1} parent=43 // pred_check_branch
          %818 = sbr.rel (%p816) target = $region56
        $region55: #{tpu_custom_call.1} parent=43 // pred_region
          %s820 = ssub.s32 128, 128
          %821 = vsyncadd %s812, %s820
          %s822 = smul.addr %s24, 128
          %s823 = scalar_lea.hbm %s6, %s822
          %s825 = sshll.u32 %s815, 4
          %s826 = int_to_ptr.vmem [resolvable:$true] %s825
          %828 = dma.vmem_to_hbm [thread:$0]  %s826, 128, %s823, %s812
        $region56: #{tpu_custom_call.1} parent=43 // pred_fallthru
          _
      $region44: #{tpu_custom_call.1} parent=5 // pred_fallthru
        _
      %p829 = scmp.le.s32.totalorder 2, %s19
      // Predicated region
      $region57: #{tpu_custom_call.1} parent=5 // pred_check
        %p830 = pneg %p829
      $region58: #{tpu_custom_call.1} parent=5 // pred_check_branch
        %832 = sbr.rel (%p830) target = $region60
      $region59: #{tpu_custom_call.1} parent=5 // pred_region
        %s833 = ssub.s32 %s19, 2
        // Predicated region
        $region61: #{tpu_custom_call.1} parent=59 // pred_check
          %p834 = pneg %p184
        $region62: #{tpu_custom_call.1} parent=59 // pred_check_branch
          %836 = sbr.rel (%p834) target = $region64
        $region63: #{tpu_custom_call.1} parent=59 // pred_region
          %s837 = sand.u32 %s169, 1
          %s838 = scalar_lea.sflag [#allocation4], %s837
          %s839 = sand.u32 %s169, 1
          %s840 = smul.addr %s839, 8
          %s841 = scalar_lea.vmem [#allocation7], %s840
          %842 = dma.done %s838, 128
        $region64: #{tpu_custom_call.1} parent=59 // pred_fallthru
          _
      $region60: #{tpu_custom_call.1} parent=5 // pred_fallthru
        _
    $region6: #{tpu_custom_call.1} parent=1 // loop_footer
      %s23 = sadd.s32 1, %s19
    $region7: #{tpu_custom_call.1} parent=1 // loop_footer_branch
      %18 = sbr.rel target = $region3
    $region8: #{tpu_custom_call.1} parent=1 // loop_exit
      _
    %843 = vsyncpa [#allocation3], 1
    %s844 = scalar_lea.sflag [#allocation3], 1
    %845 = vsyncpa %s844, 1
    %846 = vsyncpa [#allocation6], 1
    %s847 = scalar_lea.sflag [#allocation6], 1
    %848 = vsyncpa %s847, 1
    %849 = vsyncpa [#allocation4], 1
    %s850 = scalar_lea.sflag [#allocation4], 1
    %851 = vsyncpa %s850, 1

</llo_original>
